<compile_context>
chip_gen: v7x
topology: tpu7x:2x2x1
jax: 0.10.0
libtpu: 0.0.40
codegen_flags: <defaults>
</compile_context>

<pallas_src>
import jax
import jax.numpy as jnp
from jax.experimental import pallas as pl
from jax.experimental.pallas import tpu as pltpu

HIDDEN = 128
HIGH = jax.lax.Precision.HIGHEST


def _cdiv(a, b):
    return -(-a // b)


def _round_up(n, m):
    return ((n + m - 1) // m) * m


# ----------------------------- Pallas kernel ------------------------------

def _discriminator_mlp_kernel(x_ref, lab_ref, w1x_ref, t_tab_ref, w2_ref,
                              b2_ref, out_ref):
    """out_row = lane-packed( sum(relu(x @ W1x + t_table[label]) * w2, -1) + b2 )

    x_ref     : (TILE_B, in_dim)   f32   batch tile of raw inputs (cast to bf16 here)
    lab_ref   : (TILE_B, 1)        int32 labels for this tile
    w1x_ref   : (in_dim, HIDDEN)   bf16  first-layer weights (VMEM resident)
    t_tab_ref : (nclass, HIDDEN)   f32   label_emb @ W1_emb + b1 (VMEM resident)
    w2_ref    : (HIDDEN, 1)        f32   second-layer weights
    b2_ref    : (1, 1)             f32   SMEM scalar
    out_ref   : (1, TILE_B)        f32   lane-dense logit row
    """
    nclass = t_tab_ref.shape[0]

    # First linear: bf16 MXU matmul (in-kernel cast halves the x HBM stream
    # compared to a wrapper-side bf16 cast), f32 accumulation.
    h = jnp.dot(x_ref[...].astype(jnp.bfloat16), w1x_ref[...],
                preferred_element_type=jnp.float32)               # (TILE_B, HIDDEN)

    # Folded Embedding + concat + b1: t[b, :] = t_table[labels[b], :].
    # nclass is tiny, so rebuild it with exact-f32 VPU select-adds against the
    # VMEM-resident table instead of materializing a (B, 128) stream in HBM.
    lab = lab_ref[...]                                            # (TILE_B, 1)
    t = jnp.zeros_like(h)
    for c in range(nclass):                                       # static, tiny
        t = t + jnp.where(lab == c, t_tab_ref[c:c + 1, :], 0.0)

    h = jnp.maximum(h + t, 0.0)                                   # ReLU in f32

    # Second linear (N=1): transpose to lane-major batch (XLU), VPU multiply,
    # sublane reduce -> a single lane-dense (1, TILE_B) row; 4 B/row writeback.
    h_t = jnp.transpose(h)                                        # (HIDDEN, TILE_B)
    v = jnp.sum(h_t * w2_ref[...], axis=0, keepdims=True)         # (1, TILE_B)
    out_ref[...] = v + b2_ref[0, 0]


# ------------------------------- wrapper -----------------------------------

def _choose_tiling(B, in_dim, nclass, *, cap=2048, gran=128, budget=40 * 2**20):
    """Pick (tile_b, num_tiles): big tiles, minimal padding, VMEM-budgeted,
    and >=2 grid steps when the batch allows it (v7x has 2 TensorCores)."""
    per_row = 2 * in_dim * 4 + 4 * HIDDEN * 4 + 16         # x tile + intermediates
    fixed = 2 * in_dim * HIDDEN * 2 + 2 * nclass * HIDDEN * 4 + 2 * HIDDEN * 4
    max_rows = max(gran, (budget - fixed) // per_row)
    cap = max(gran, min(cap, (max_rows // gran) * gran))
    b_ceil = _round_up(B, gran)
    num_tiles = _cdiv(b_ceil, cap)
    if b_ceil // gran >= 2:                                 # shard across 2 TCs (v7x)
        num_tiles = max(num_tiles, 2)
    tile_b = _round_up(_cdiv(b_ceil, num_tiles), gran)
    return tile_b, num_tiles


def discriminator_forward(x, labels, params, *, tile_b=None):
    """Discriminator.forward: validity logits for (x, labels)."""
    B, in_dim = x.shape
    nclass = params["label_emb"].shape[0]
    w1 = params["w1"]                                   # (in_dim + nclass, HIDDEN)
    w1x = w1[:in_dim].astype(jnp.bfloat16)              # (in_dim, HIDDEN) bf16

    # Fold Embedding + concat + b1 into a tiny per-class table (VMEM resident).
    t_table = (jnp.dot(params["label_emb"], w1[in_dim:], precision=HIGH)
               + params["b1"]).astype(jnp.float32)      # (nclass, HIDDEN)

    if tile_b is None:
        tile_b, num_tiles = _choose_tiling(B, in_dim, nclass)
    else:
        num_tiles = _cdiv(B, tile_b)
    b_pad = tile_b * num_tiles

    if b_pad != B:
        x = jnp.pad(x, ((0, b_pad - B), (0, 0)))
        labels = jnp.pad(labels, ((0, b_pad - B),))
    labels2d = labels.astype(jnp.int32).reshape(b_pad, 1)
    w2_col = params["w2"].astype(jnp.float32).reshape(HIDDEN, 1)
    b2 = params["b2"].astype(jnp.float32).reshape(1, 1)

    # Honest cost hint (post output / t_rows fixes).
    flops = (2 * b_pad * in_dim * HIDDEN + 3 * b_pad * nclass * HIDDEN
             + 3 * b_pad * HIDDEN)
    bytes_accessed = (b_pad * in_dim * 4 + b_pad * 4 + in_dim * HIDDEN * 2
                      + nclass * HIDDEN * 4 + HIDDEN * 4 + 4 + b_pad * 4)

    # Explicit VMEM budget (double-buffered tiles + resident weights + temps);
    # stays well under v7x's 64 MiB physical per-TC VMEM.
    vmem_est = (2 * tile_b * in_dim * 4 + 2 * tile_b * 4 + 2 * in_dim * HIDDEN * 2
                + 2 * nclass * HIDDEN * 4 + 2 * HIDDEN * 4 + 2 * tile_b * 4
                + 4 * tile_b * HIDDEN * 4)
    vmem_limit = int(min(56 * 2**20, max(32 * 2**20, vmem_est + (4 << 20))))

    out_row = pl.pallas_call(
        _discriminator_mlp_kernel,
        out_shape=jax.ShapeDtypeStruct((1, b_pad), jnp.float32),
        grid=(num_tiles,),
        in_specs=[
            pl.BlockSpec((tile_b, in_dim), lambda i: (i, 0)),     # x tile (f32)
            pl.BlockSpec((tile_b, 1), lambda i: (i, 0)),          # labels tile
            pl.BlockSpec((in_dim, HIDDEN), lambda i: (0, 0)),     # W1x (resident)
            pl.BlockSpec((nclass, HIDDEN), lambda i: (0, 0)),     # t_table (resident)
            pl.BlockSpec((HIDDEN, 1), lambda i: (0, 0)),          # w2 (resident)
            pl.BlockSpec(memory_space=pltpu.MemorySpace.SMEM),    # b2 scalar
        ],
        out_specs=pl.BlockSpec((1, tile_b), lambda i: (0, i)),    # lane-packed logits
        compiler_params=pltpu.CompilerParams(
            dimension_semantics=("parallel",),
            vmem_limit_bytes=vmem_limit),
        cost_estimate=pl.CostEstimate(
            flops=flops, transcendentals=0, bytes_accessed=bytes_accessed),
    )(x, labels2d, w1x, t_table, w2_col, b2)

    # (1, b_pad) -> (b_pad, 1) is a row-major-compatible (free) reshape.
    return out_row.reshape(b_pad, 1)[:B]


# --------------------------- parameter creation ---------------------------

def init_params(key, in_dim, nclass, hidden=HIDDEN):
    """Deterministic synthetic parameters (PyTorch-like uniform fan-in init)."""
    k_emb, k_w1, k_b1, k_w2, k_b2 = jax.random.split(key, 5)

    def unif(k, shape, fan_in):
        bound = 1.0 / jnp.sqrt(jnp.float32(fan_in))
        return jax.random.uniform(k, shape, jnp.float32, -bound, bound)

    d_in_feat = in_dim + nclass
    return {
        # nn.Embedding default init is N(0,1)
        "label_emb": jax.random.normal(k_emb, (nclass, nclass), jnp.float32),
        # Linear weights stored as (in_features, out_features)
        "w1": unif(k_w1, (d_in_feat, hidden), d_in_feat),
        "b1": unif(k_b1, (1, hidden), d_in_feat),
        "w2": unif(k_w2, (hidden, 1), hidden),
        "b2": unif(k_b2, (1, 1), hidden),
    }


# ------------------------------ references ---------------------------------

def _reference_forward_f32(x, labels, params):
    """Exact PyTorch-semantics reference (full f32)."""
    label_embed = jnp.take(params["label_emb"], labels, axis=0)
    d_in = jnp.concatenate([x, label_embed], axis=-1)
    h = jnp.maximum(jnp.dot(d_in, params["w1"], precision=HIGH) + params["b1"], 0.0)
    return jnp.dot(h, params["w2"], precision=HIGH) + params["b2"]


def _reference_forward_bf16(x, labels, params):
    """Mirrors the kernel's bf16-input / f32-accumulate arithmetic."""
    in_dim = x.shape[1]
    w1 = params["w1"]
    w1x_q = w1[:in_dim].astype(jnp.bfloat16).astype(jnp.float32)
    t_table = jnp.dot(params["label_emb"], w1[in_dim:], precision=HIGH) + params["b1"]
    t = jnp.take(t_table, labels, axis=0)
    x_q = x.astype(jnp.bfloat16).astype(jnp.float32)
    h = jnp.maximum(jnp.dot(x_q, w1x_q, precision=HIGH) + t, 0.0)
    return jnp.dot(h, params["w2"], precision=HIGH) + params["b2"]


# ---------------------------------- main -----------------------------------

if __name__ == "__main__":
    B, in_dim, nclass = 8, 32, 4

    key = jax.random.PRNGKey(0)
    k_x, k_lab, k_par = jax.random.split(key, 3)

    x = jax.random.normal(k_x, (B, in_dim), jnp.float32)
    labels = jax.random.randint(k_lab, (B,), 0, nclass, jnp.int32)
    params = init_params(k_par, in_dim, nclass)

    forward = jax.jit(discriminator_forward)
    validity = jax.block_until_ready(forward(x, labels, params))

    assert validity.shape == (B, 1)
    # Strict check against a reference using identical bf16-quantized inputs.
    ref_bf16 = _reference_forward_bf16(x, labels, params)
    assert jnp.allclose(validity, ref_bf16, atol=1e-3, rtol=1e-3)
    # Loose check against the exact f32 PyTorch-semantics reference.
    ref_f32 = _reference_forward_f32(x, labels, params)
    assert jnp.allclose(validity, ref_f32, atol=1e-1, rtol=1e-1)

    # TODO(synk): Discriminator.classify() / log_softmax head is not part of
    # forward() and is intentionally not implemented here.
    print("KERNEL_OK")
</pallas_src>

<mosaic_0001>
module attributes {stable_mosaic.version = 11 : i64} {
  func.func @_discriminator_mlp_kernel(%arg0: i32, %arg1: memref<128x32xf32, #tpu.memory_space<vmem>>, %arg2: memref<128x1xi32, #tpu.memory_space<vmem>>, %arg3: memref<32x128xbf16, #tpu.memory_space<vmem>>, %arg4: memref<4x128xf32, #tpu.memory_space<vmem>>, %arg5: memref<128x1xf32, #tpu.memory_space<vmem>>, %arg6: memref<1x1xf32, #tpu.memory_space<smem>>, %arg7: memref<1x128xf32, #tpu.memory_space<vmem>>) attributes {dimension_semantics = [#tpu.dimension_semantics<parallel>], iteration_bounds = array<i64: 1>, scalar_prefetch = 0 : i64, scratch_operands = 0 : i64, tpu.core_type = #tpu.core_type<tc>, window_params = [{transform_indices = @transform_0, window_bounds = array<i64: 128, 32>}, {transform_indices = @transform_1, window_bounds = array<i64: 128, 1>}, {pipeline_mode = #tpu.pipeline_mode<synchronous>, transform_indices = @transform_2, window_bounds = array<i64: 32, 128>}, {pipeline_mode = #tpu.pipeline_mode<synchronous>, transform_indices = @transform_3, window_bounds = array<i64: 4, 128>}, {pipeline_mode = #tpu.pipeline_mode<synchronous>, transform_indices = @transform_4, window_bounds = array<i64: 128, 1>}, {transform_indices = @transform_5, window_bounds = array<i64: 1, 1>}, {transform_indices = @transform_6, window_bounds = array<i64: 1, 128>}]} {
    %c0 = arith.constant 0 : index
    %c0_0 = arith.constant 0 : index
    %0 = vector.load %arg1[%c0, %c0_0] : memref<128x32xf32, #tpu.memory_space<vmem>>, vector<128x32xf32>
    %1 = arith.truncf %0 : vector<128x32xf32> to vector<128x32xbf16>
    %c0_1 = arith.constant 0 : index
    %c0_2 = arith.constant 0 : index
    %2 = vector.load %arg3[%c0_1, %c0_2] : memref<32x128xbf16, #tpu.memory_space<vmem>>, vector<32x128xbf16>
    %cst = arith.constant dense<0.000000e+00> : vector<128x128xf32>
    %3 = tpu.matmul %1, %2, %cst {dimension_numbers = #tpu.dot_dimension_numbers<[1], [0], [0], [1], [0, 0, 1, 1], [], []>} : vector<128x32xbf16>, vector<32x128xbf16>, vector<128x128xf32> -> vector<128x128xf32>
    %c0_3 = arith.constant 0 : index
    %c0_4 = arith.constant 0 : index
    %4 = vector.load %arg2[%c0_3, %c0_4] : memref<128x1xi32, #tpu.memory_space<vmem>>, vector<128x1xi32>
    %cst_5 = arith.constant 0.000000e+00 : f32
    %5 = vector.broadcast %cst_5 : f32 to vector<128x128xf32>
    %c0_i32 = arith.constant 0 : i32
    %6 = vector.broadcast %c0_i32 : i32 to vector<128x1xi32>
    %7 = arith.cmpi eq, %4, %6 : vector<128x1xi32>
    %c0_6 = arith.constant 0 : index
    %c0_7 = arith.constant 0 : index
    %8 = vector.load %arg4[%c0_6, %c0_7] : memref<4x128xf32, #tpu.memory_space<vmem>>, vector<1x128xf32>
    %cst_8 = arith.constant 0.000000e+00 : f32
    %9 = vector.shape_cast %7 : vector<128x1xi1> to vector<128x1xi1>
    %10 = vector.broadcast %9 : vector<128x1xi1> to vector<128x128xi1>
    %11 = vector.shape_cast %8 : vector<1x128xf32> to vector<1x128xf32>
    %12 = vector.broadcast %11 : vector<1x128xf32> to vector<128x128xf32>
    %13 = vector.broadcast %cst_8 : f32 to vector<128x128xf32>
    %14 = arith.select %10, %12, %13 : vector<128x128xi1>, vector<128x128xf32>
    %15 = arith.addf %5, %14 : vector<128x128xf32>
    %c1_i32 = arith.constant 1 : i32
    %16 = vector.broadcast %c1_i32 : i32 to vector<128x1xi32>
    %17 = arith.cmpi eq, %4, %16 : vector<128x1xi32>
    %c1 = arith.constant 1 : index
    %c0_9 = arith.constant 0 : index
    %18 = vector.load %arg4[%c1, %c0_9] : memref<4x128xf32, #tpu.memory_space<vmem>>, vector<1x128xf32>
    %cst_10 = arith.constant 0.000000e+00 : f32
    %19 = vector.shape_cast %17 : vector<128x1xi1> to vector<128x1xi1>
    %20 = vector.broadcast %19 : vector<128x1xi1> to vector<128x128xi1>
    %21 = vector.shape_cast %18 : vector<1x128xf32> to vector<1x128xf32>
    %22 = vector.broadcast %21 : vector<1x128xf32> to vector<128x128xf32>
    %23 = vector.broadcast %cst_10 : f32 to vector<128x128xf32>
    %24 = arith.select %20, %22, %23 : vector<128x128xi1>, vector<128x128xf32>
    %25 = arith.addf %15, %24 : vector<128x128xf32>
    %c2_i32 = arith.constant 2 : i32
    %26 = vector.broadcast %c2_i32 : i32 to vector<128x1xi32>
    %27 = arith.cmpi eq, %4, %26 : vector<128x1xi32>
    %c2 = arith.constant 2 : index
    %c0_11 = arith.constant 0 : index
    %28 = vector.load %arg4[%c2, %c0_11] : memref<4x128xf32, #tpu.memory_space<vmem>>, vector<1x128xf32>
    %cst_12 = arith.constant 0.000000e+00 : f32
    %29 = vector.shape_cast %27 : vector<128x1xi1> to vector<128x1xi1>
    %30 = vector.broadcast %29 : vector<128x1xi1> to vector<128x128xi1>
    %31 = vector.shape_cast %28 : vector<1x128xf32> to vector<1x128xf32>
    %32 = vector.broadcast %31 : vector<1x128xf32> to vector<128x128xf32>
    %33 = vector.broadcast %cst_12 : f32 to vector<128x128xf32>
    %34 = arith.select %30, %32, %33 : vector<128x128xi1>, vector<128x128xf32>
    %35 = arith.addf %25, %34 : vector<128x128xf32>
    %c3_i32 = arith.constant 3 : i32
    %36 = vector.broadcast %c3_i32 : i32 to vector<128x1xi32>
    %37 = arith.cmpi eq, %4, %36 : vector<128x1xi32>
    %c3 = arith.constant 3 : index
    %c0_13 = arith.constant 0 : index
    %38 = vector.load %arg4[%c3, %c0_13] : memref<4x128xf32, #tpu.memory_space<vmem>>, vector<1x128xf32>
    %cst_14 = arith.constant 0.000000e+00 : f32
    %39 = vector.shape_cast %37 : vector<128x1xi1> to vector<128x1xi1>
    %40 = vector.broadcast %39 : vector<128x1xi1> to vector<128x128xi1>
    %41 = vector.shape_cast %38 : vector<1x128xf32> to vector<1x128xf32>
    %42 = vector.broadcast %41 : vector<1x128xf32> to vector<128x128xf32>
    %43 = vector.broadcast %cst_14 : f32 to vector<128x128xf32>
    %44 = arith.select %40, %42, %43 : vector<128x128xi1>, vector<128x128xf32>
    %45 = arith.addf %35, %44 : vector<128x128xf32>
    %46 = arith.addf %3, %45 : vector<128x128xf32>
    %cst_15 = arith.constant 0.000000e+00 : f32
    %47 = vector.broadcast %cst_15 : f32 to vector<128x128xf32>
    %48 = arith.maximumf %46, %47 : vector<128x128xf32>
    %49 = tpu.transpose %48, [1, 0] : vector<128x128xf32> -> vector<128x128xf32>
    %c0_16 = arith.constant 0 : index
    %c0_17 = arith.constant 0 : index
    %50 = vector.load %arg5[%c0_16, %c0_17] : memref<128x1xf32, #tpu.memory_space<vmem>>, vector<128x1xf32>
    %51 = vector.broadcast %50 : vector<128x1xf32> to vector<128x128xf32>
    %52 = arith.mulf %49, %51 : vector<128x128xf32>
    %cst_18 = arith.constant dense<0.000000e+00> : vector<128xf32>
    %53 = vector.multi_reduction <add>, %52, %cst_18 [0] : vector<128x128xf32> to vector<128xf32>
    %54 = vector.shape_cast %53 : vector<128xf32> to vector<1x128xf32>
    %c0_19 = arith.constant 0 : index
    %c0_20 = arith.constant 0 : index
    %55 = memref.load %arg6[%c0_19, %c0_20] : memref<1x1xf32, #tpu.memory_space<smem>>
    %56 = vector.broadcast %55 : f32 to vector<1x128xf32>
    %57 = arith.addf %54, %56 : vector<1x128xf32>
    %c0_21 = arith.constant 0 : index
    %c0_22 = arith.constant 0 : index
    %58 = vector.load %arg7[%c0_21, %c0_22] : memref<1x128xf32, #tpu.memory_space<vmem>>, vector<1x128xf32>
    tpu.vector_store %arg7[%c0_21, %c0_22], %57 {strides = array<i32>} : memref<1x128xf32, #tpu.memory_space<vmem>>, vector<1x128xf32>,
    return
  }
  func.func @transform_0(%arg0: i32) -> (i32, i32) {
    %c0_i32 = arith.constant 0 : i32
    %c0_i32_0 = arith.constant 0 : i32
    return %arg0, %c0_i32 : i32, i32
  }
  func.func @transform_1(%arg0: i32) -> (i32, i32) {
    %c0_i32 = arith.constant 0 : i32
    %c0_i32_0 = arith.constant 0 : i32
    return %arg0, %c0_i32 : i32, i32
  }
  func.func @transform_2(%arg0: i32) -> (i32, i32) {
    %c0_i32 = arith.constant 0 : i32
    %c0_i32_0 = arith.constant 0 : i32
    %c0_i32_1 = arith.constant 0 : i32
    return %c0_i32, %c0_i32_0 : i32, i32
  }
  func.func @transform_3(%arg0: i32) -> (i32, i32) {
    %c0_i32 = arith.constant 0 : i32
    %c0_i32_0 = arith.constant 0 : i32
    %c0_i32_1 = arith.constant 0 : i32
    return %c0_i32, %c0_i32_0 : i32, i32
  }
  func.func @transform_4(%arg0: i32) -> (i32, i32) {
    %c0_i32 = arith.constant 0 : i32
    %c0_i32_0 = arith.constant 0 : i32
    %c0_i32_1 = arith.constant 0 : i32
    return %c0_i32, %c0_i32_0 : i32, i32
  }
  func.func @transform_5(%arg0: i32) -> (i32, i32) {
    %c0_i32 = arith.constant 0 : i32
    %c0_i32_0 = arith.constant 0 : i32
    %c0_i32_1 = arith.constant 0 : i32
    return %c0_i32, %c0_i32_0 : i32, i32
  }
  func.func @transform_6(%arg0: i32) -> (i32, i32) {
    %c0_i32 = arith.constant 0 : i32
    %c0_i32_0 = arith.constant 0 : i32
    return %c0_i32, %arg0 : i32, i32
  }
}

</mosaic_0001>

<llo_original>
// kernel: discriminator_forward.1
$region0: #{discriminator_forward.1}
  #allocation0 [shape = 'u32[]', space=smem, size = 0x4, offset = 0x4, fixed_abs, tag = 'smem constant byte address 0x4 - core index']
  #allocation1 [shape = 'u32[144,128]{1,0:T(1,128)}', space=vmem, size = 0x12000, scoped, tag = 'internal scratch']
  #allocation2 [shape = 'f32[1,1]{1,0:T(1,128)S(6)}', space=smem, size = 0x200, scoped, tag = 'scoped memory for discriminator_forward.1']
  %s0 = inlined_call_operand.vmem [shape: f32[128,32], index: 0, kind: input, shape index: {}]
  %s1 = inlined_call_operand.vmem [shape: s32[128,1], index: 1, kind: input, shape index: {}]
  %s2 = inlined_call_operand.vmem [shape: bf16[32,128], index: 2, kind: input, shape index: {}]
  %s3 = inlined_call_operand.vmem [shape: f32[4,128], index: 3, kind: input, shape index: {}]
  %s4 = inlined_call_operand.vmem [shape: f32[128,1], index: 4, kind: input, shape index: {}]
  %s5 = inlined_call_operand.<no memory space> [shape: f32[1,1], index: 5, kind: input, shape index: {}]
  %s6 = inlined_call_operand.vmem [shape: f32[1,128], index: 6, kind: output, shape index: {}]
  %s7 = sld [smem:[#allocation0]]
  $region34: #{discriminator_forward.1} parent=0
    _
  %s9 = ssub.s32 1, %s7
  %s10 = scalar_select 0, %s9, %s7
  %11 = sst [smem:[#allocation2]] %s5
  // Predicated region
  $region2: #{discriminator_forward.1} parent=0 // pred_check
    _
  $region3: #{discriminator_forward.1} parent=0 // pred_check_branch
    %13 = sbr.rel (0) target = $region5
  $region4: #{discriminator_forward.1} parent=0 // pred_region
    _
  $region5: #{discriminator_forward.1} parent=0 // pred_fallthru
    _
  // Predicated region
  $region6: #{discriminator_forward.1} parent=0 // pred_check
    _
  $region7: #{discriminator_forward.1} parent=0 // pred_check_branch
    %15 = sbr.rel (0) target = $region9
  $region8: #{discriminator_forward.1} parent=0 // pred_region
    _
  $region9: #{discriminator_forward.1} parent=0 // pred_fallthru
    _
  // Predicated region
  $region10: #{discriminator_forward.1} parent=0 // pred_check
    _
  $region11: #{discriminator_forward.1} parent=0 // pred_check_branch
    %17 = sbr.rel (0) target = $region13
  $region12: #{discriminator_forward.1} parent=0 // pred_region
    _
  $region13: #{discriminator_forward.1} parent=0 // pred_fallthru
    _
  // Predicated region
  $region14: #{discriminator_forward.1} parent=0 // pred_check
    _
  $region15: #{discriminator_forward.1} parent=0 // pred_check_branch
    %19 = sbr.rel (0) target = $region17
  $region16: #{discriminator_forward.1} parent=0 // pred_region
    _
  $region17: #{discriminator_forward.1} parent=0 // pred_fallthru
    _
  // Predicated region
  $region18: #{discriminator_forward.1} parent=0 // pred_check
    _
  $region19: #{discriminator_forward.1} parent=0 // pred_check_branch
    %21 = sbr.rel (0) target = $region21
  $region20: #{discriminator_forward.1} parent=0 // pred_region
    _
  $region21: #{discriminator_forward.1} parent=0 // pred_fallthru
    _
  // Predicated region
  $region22: #{discriminator_forward.1} parent=0 // pred_check
    _
  $region23: #{discriminator_forward.1} parent=0 // pred_check_branch
    %23 = sbr.rel (0) target = $region25
  $region24: #{discriminator_forward.1} parent=0 // pred_region
    _
  $region25: #{discriminator_forward.1} parent=0 // pred_fallthru
    _
  %v25 = vld [vmem:[%s0] sm:$0xff]
  %v26 = vld [vmem:[%s0 + $0x8] sm:$0xff]
  %v27 = vld [vmem:[%s0 + $0x10] sm:$0xff]
  %v28 = vld [vmem:[%s0 + $0x18] sm:$0xff]
  %v29 = vld [vmem:[%s0 + $0x20] sm:$0xff]
  %v30 = vld [vmem:[%s0 + $0x28] sm:$0xff]
  %v31 = vld [vmem:[%s0 + $0x30] sm:$0xff]
  %v32 = vld [vmem:[%s0 + $0x38] sm:$0xff]
  %v33 = vld [vmem:[%s0 + $0x40] sm:$0xff]
  %v34 = vld [vmem:[%s0 + $0x48] sm:$0xff]
  %v35 = vld [vmem:[%s0 + $0x50] sm:$0xff]
  %v36 = vld [vmem:[%s0 + $0x58] sm:$0xff]
  %v37 = vld [vmem:[%s0 + $0x60] sm:$0xff]
  %v38 = vld [vmem:[%s0 + $0x68] sm:$0xff]
  %v39 = vld [vmem:[%s0 + $0x70] sm:$0xff]
  %v40 = vld [vmem:[%s0 + $0x78] sm:$0xff]
  %v41 = vpack.c.bf16 %v26, %v25
  %v42 = vpack.c.bf16 %v28, %v27
  %v43 = vpack.c.bf16 %v30, %v29
  %v44 = vpack.c.bf16 %v32, %v31
  %v45 = vpack.c.bf16 %v34, %v33
  %v46 = vpack.c.bf16 %v36, %v35
  %v47 = vpack.c.bf16 %v38, %v37
  %v48 = vpack.c.bf16 %v40, %v39
  %v49 = vld [vmem:[%s2] sm:$0xf]
  %v50 = vld [vmem:[%s2 + $0x4] sm:$0xf]
  %v51 = vld [vmem:[%s2 + $0x8] sm:$0xf]
  %v52 = vld [vmem:[%s2 + $0xc] sm:$0xf]
  %v53 = vld [vmem:[%s1] sm:$0xff]
  %v54 = vld [vmem:[%s1 + $0x8] sm:$0xff]
  %v55 = vld [vmem:[%s1 + $0x10] sm:$0xff]
  %v56 = vld [vmem:[%s1 + $0x18] sm:$0xff]
  %v57 = vld [vmem:[%s1 + $0x20] sm:$0xff]
  %v58 = vld [vmem:[%s1 + $0x28] sm:$0xff]
  %v59 = vld [vmem:[%s1 + $0x30] sm:$0xff]
  %v60 = vld [vmem:[%s1 + $0x38] sm:$0xff]
  %v61 = vld [vmem:[%s1 + $0x40] sm:$0xff]
  %v62 = vld [vmem:[%s1 + $0x48] sm:$0xff]
  %v63 = vld [vmem:[%s1 + $0x50] sm:$0xff]
  %v64 = vld [vmem:[%s1 + $0x58] sm:$0xff]
  %v65 = vld [vmem:[%s1 + $0x60] sm:$0xff]
  %v66 = vld [vmem:[%s1 + $0x68] sm:$0xff]
  %v67 = vld [vmem:[%s1 + $0x70] sm:$0xff]
  %v68 = vld [vmem:[%s1 + $0x78] sm:$0xff]
  %vm69 = vcmp.eq.s32.totalorder %v53, 0
  %vm70 = vcmp.eq.s32.totalorder %v54, 0
  %vm71 = vcmp.eq.s32.totalorder %v55, 0
  %vm72 = vcmp.eq.s32.totalorder %v56, 0
  %vm73 = vcmp.eq.s32.totalorder %v57, 0
  %vm74 = vcmp.eq.s32.totalorder %v58, 0
  %vm75 = vcmp.eq.s32.totalorder %v59, 0
  %vm76 = vcmp.eq.s32.totalorder %v60, 0
  %vm77 = vcmp.eq.s32.totalorder %v61, 0
  %vm78 = vcmp.eq.s32.totalorder %v62, 0
  %vm79 = vcmp.eq.s32.totalorder %v63, 0
  %vm80 = vcmp.eq.s32.totalorder %v64, 0
  %vm81 = vcmp.eq.s32.totalorder %v65, 0
  %vm82 = vcmp.eq.s32.totalorder %v66, 0
  %vm83 = vcmp.eq.s32.totalorder %v67, 0
  %vm84 = vcmp.eq.s32.totalorder %v68, 0
  %v85 = vld [vmem:[%s3] sm:$0x1]
  %v86 = vsel %vm69, 1, 0
  %v87 = vsel %vm70, 1, 0
  %v88 = vsel %vm71, 1, 0
  %v89 = vsel %vm72, 1, 0
  %v90 = vsel %vm73, 1, 0
  %v91 = vsel %vm74, 1, 0
  %v92 = vsel %vm75, 1, 0
  %v93 = vsel %vm76, 1, 0
  %v94 = vsel %vm77, 1, 0
  %v95 = vsel %vm78, 1, 0
  %v96 = vsel %vm79, 1, 0
  %v97 = vsel %vm80, 1, 0
  %v98 = vsel %vm81, 1, 0
  %v99 = vsel %vm82, 1, 0
  %v100 = vsel %vm83, 1, 0
  %v101 = vsel %vm84, 1, 0
  %102 = vset.pattern.permute.xlu0 0
  %103 = vperm.xlu0 %102, %v86
  %v104 = vpop.permute.xlu0 %103
  %105 = vset.pattern.permute.xlu0 0
  %106 = vperm.xlu0 %105, %v87
  %v107 = vpop.permute.xlu0 %106
  %108 = vset.pattern.permute.xlu0 0
  %109 = vperm.xlu0 %108, %v88
  %v110 = vpop.permute.xlu0 %109
  %111 = vset.pattern.permute.xlu0 0
  %112 = vperm.xlu0 %111, %v89
  %v113 = vpop.permute.xlu0 %112
  %114 = vset.pattern.permute.xlu0 0
  %115 = vperm.xlu0 %114, %v90
  %v116 = vpop.permute.xlu0 %115
  %117 = vset.pattern.permute.xlu0 0
  %118 = vperm.xlu0 %117, %v91
  %v119 = vpop.permute.xlu0 %118
  %120 = vset.pattern.permute.xlu0 0
  %121 = vperm.xlu0 %120, %v92
  %v122 = vpop.permute.xlu0 %121
  %123 = vset.pattern.permute.xlu0 0
  %124 = vperm.xlu0 %123, %v93
  %v125 = vpop.permute.xlu0 %124
  %126 = vset.pattern.permute.xlu0 0
  %127 = vperm.xlu0 %126, %v94
  %v128 = vpop.permute.xlu0 %127
  %129 = vset.pattern.permute.xlu0 0
  %130 = vperm.xlu0 %129, %v95
  %v131 = vpop.permute.xlu0 %130
  %132 = vset.pattern.permute.xlu0 0
  %133 = vperm.xlu0 %132, %v96
  %v134 = vpop.permute.xlu0 %133
  %135 = vset.pattern.permute.xlu0 0
  %136 = vperm.xlu0 %135, %v97
  %v137 = vpop.permute.xlu0 %136
  %138 = vset.pattern.permute.xlu0 0
  %139 = vperm.xlu0 %138, %v98
  %v140 = vpop.permute.xlu0 %139
  %141 = vset.pattern.permute.xlu0 0
  %142 = vperm.xlu0 %141, %v99
  %v143 = vpop.permute.xlu0 %142
  %144 = vset.pattern.permute.xlu0 0
  %145 = vperm.xlu0 %144, %v100
  %v146 = vpop.permute.xlu0 %145
  %147 = vset.pattern.permute.xlu0 0
  %148 = vperm.xlu0 %147, %v101
  %v149 = vpop.permute.xlu0 %148
  %vm150 = vcmp.eq.s32.totalorder %v104, 1
  %vm151 = vcmp.eq.s32.totalorder %v107, 1
  %vm152 = vcmp.eq.s32.totalorder %v110, 1
  %vm153 = vcmp.eq.s32.totalorder %v113, 1
  %vm154 = vcmp.eq.s32.totalorder %v116, 1
  %vm155 = vcmp.eq.s32.totalorder %v119, 1
  %vm156 = vcmp.eq.s32.totalorder %v122, 1
  %vm157 = vcmp.eq.s32.totalorder %v125, 1
  %vm158 = vcmp.eq.s32.totalorder %v128, 1
  %vm159 = vcmp.eq.s32.totalorder %v131, 1
  %vm160 = vcmp.eq.s32.totalorder %v134, 1
  %vm161 = vcmp.eq.s32.totalorder %v137, 1
  %vm162 = vcmp.eq.s32.totalorder %v140, 1
  %vm163 = vcmp.eq.s32.totalorder %v143, 1
  %vm164 = vcmp.eq.s32.totalorder %v146, 1
  %vm165 = vcmp.eq.s32.totalorder %v149, 1
  %v166 = vlaneseq
  %v167 = vshrl.u32 %v166, 7
  %v168 = vsub.s32 0, %v167
  %v169 = vrot.slane %v85, %v168
  %v170 = vsel %vm150, %v169, 0.0
  %v171 = vsel %vm151, %v169, 0.0
  %v172 = vsel %vm152, %v169, 0.0
  %v173 = vsel %vm153, %v169, 0.0
  %v174 = vsel %vm154, %v169, 0.0
  %v175 = vsel %vm155, %v169, 0.0
  %v176 = vsel %vm156, %v169, 0.0
  %v177 = vsel %vm157, %v169, 0.0
  %v178 = vsel %vm158, %v169, 0.0
  %v179 = vsel %vm159, %v169, 0.0
  %v180 = vsel %vm160, %v169, 0.0
  %v181 = vsel %vm161, %v169, 0.0
  %v182 = vsel %vm162, %v169, 0.0
  %v183 = vsel %vm163, %v169, 0.0
  %v184 = vsel %vm164, %v169, 0.0
  %v185 = vsel %vm165, %v169, 0.0
  %v186 = vadd.f32 %v170, 0.0
  %v187 = vadd.f32 %v171, 0.0
  %v188 = vadd.f32 %v172, 0.0
  %v189 = vadd.f32 %v173, 0.0
  %v190 = vadd.f32 %v174, 0.0
  %v191 = vadd.f32 %v175, 0.0
  %v192 = vadd.f32 %v176, 0.0
  %v193 = vadd.f32 %v177, 0.0
  %v194 = vadd.f32 %v178, 0.0
  %v195 = vadd.f32 %v179, 0.0
  %v196 = vadd.f32 %v180, 0.0
  %v197 = vadd.f32 %v181, 0.0
  %v198 = vadd.f32 %v182, 0.0
  %v199 = vadd.f32 %v183, 0.0
  %v200 = vadd.f32 %v184, 0.0
  %v201 = vadd.f32 %v185, 0.0
  %vm202 = vcmp.eq.s32.totalorder %v53, 1
  %vm203 = vcmp.eq.s32.totalorder %v54, 1
  %vm204 = vcmp.eq.s32.totalorder %v55, 1
  %vm205 = vcmp.eq.s32.totalorder %v56, 1
  %vm206 = vcmp.eq.s32.totalorder %v57, 1
  %vm207 = vcmp.eq.s32.totalorder %v58, 1
  %vm208 = vcmp.eq.s32.totalorder %v59, 1
  %vm209 = vcmp.eq.s32.totalorder %v60, 1
  %vm210 = vcmp.eq.s32.totalorder %v61, 1
  %vm211 = vcmp.eq.s32.totalorder %v62, 1
  %vm212 = vcmp.eq.s32.totalorder %v63, 1
  %vm213 = vcmp.eq.s32.totalorder %v64, 1
  %vm214 = vcmp.eq.s32.totalorder %v65, 1
  %vm215 = vcmp.eq.s32.totalorder %v66, 1
  %vm216 = vcmp.eq.s32.totalorder %v67, 1
  %vm217 = vcmp.eq.s32.totalorder %v68, 1
  %v218 = vld [vmem:[%s3 + $0x1] sm:$0x1]
  %v219 = vsel %vm202, 1, 0
  %v220 = vsel %vm203, 1, 0
  %v221 = vsel %vm204, 1, 0
  %v222 = vsel %vm205, 1, 0
  %v223 = vsel %vm206, 1, 0
  %v224 = vsel %vm207, 1, 0
  %v225 = vsel %vm208, 1, 0
  %v226 = vsel %vm209, 1, 0
  %v227 = vsel %vm210, 1, 0
  %v228 = vsel %vm211, 1, 0
  %v229 = vsel %vm212, 1, 0
  %v230 = vsel %vm213, 1, 0
  %v231 = vsel %vm214, 1, 0
  %v232 = vsel %vm215, 1, 0
  %v233 = vsel %vm216, 1, 0
  %v234 = vsel %vm217, 1, 0
  %235 = vset.pattern.permute.xlu0 0
  %236 = vperm.xlu0 %235, %v219
  %v237 = vpop.permute.xlu0 %236
  %238 = vset.pattern.permute.xlu0 0
  %239 = vperm.xlu0 %238, %v220
  %v240 = vpop.permute.xlu0 %239
  %241 = vset.pattern.permute.xlu0 0
  %242 = vperm.xlu0 %241, %v221
  %v243 = vpop.permute.xlu0 %242
  %244 = vset.pattern.permute.xlu0 0
  %245 = vperm.xlu0 %244, %v222
  %v246 = vpop.permute.xlu0 %245
  %247 = vset.pattern.permute.xlu0 0
  %248 = vperm.xlu0 %247, %v223
  %v249 = vpop.permute.xlu0 %248
  %250 = vset.pattern.permute.xlu0 0
  %251 = vperm.xlu0 %250, %v224
  %v252 = vpop.permute.xlu0 %251
  %253 = vset.pattern.permute.xlu0 0
  %254 = vperm.xlu0 %253, %v225
  %v255 = vpop.permute.xlu0 %254
  %256 = vset.pattern.permute.xlu0 0
  %257 = vperm.xlu0 %256, %v226
  %v258 = vpop.permute.xlu0 %257
  %259 = vset.pattern.permute.xlu0 0
  %260 = vperm.xlu0 %259, %v227
  %v261 = vpop.permute.xlu0 %260
  %262 = vset.pattern.permute.xlu0 0
  %263 = vperm.xlu0 %262, %v228
  %v264 = vpop.permute.xlu0 %263
  %265 = vset.pattern.permute.xlu0 0
  %266 = vperm.xlu0 %265, %v229
  %v267 = vpop.permute.xlu0 %266
  %268 = vset.pattern.permute.xlu0 0
  %269 = vperm.xlu0 %268, %v230
  %v270 = vpop.permute.xlu0 %269
  %271 = vset.pattern.permute.xlu0 0
  %272 = vperm.xlu0 %271, %v231
  %v273 = vpop.permute.xlu0 %272
  %274 = vset.pattern.permute.xlu0 0
  %275 = vperm.xlu0 %274, %v232
  %v276 = vpop.permute.xlu0 %275
  %277 = vset.pattern.permute.xlu0 0
  %278 = vperm.xlu0 %277, %v233
  %v279 = vpop.permute.xlu0 %278
  %280 = vset.pattern.permute.xlu0 0
  %281 = vperm.xlu0 %280, %v234
  %v282 = vpop.permute.xlu0 %281
  %vm283 = vcmp.eq.s32.totalorder %v237, 1
  %vm284 = vcmp.eq.s32.totalorder %v240, 1
  %vm285 = vcmp.eq.s32.totalorder %v243, 1
  %vm286 = vcmp.eq.s32.totalorder %v246, 1
  %vm287 = vcmp.eq.s32.totalorder %v249, 1
  %vm288 = vcmp.eq.s32.totalorder %v252, 1
  %vm289 = vcmp.eq.s32.totalorder %v255, 1
  %vm290 = vcmp.eq.s32.totalorder %v258, 1
  %vm291 = vcmp.eq.s32.totalorder %v261, 1
  %vm292 = vcmp.eq.s32.totalorder %v264, 1
  %vm293 = vcmp.eq.s32.totalorder %v267, 1
  %vm294 = vcmp.eq.s32.totalorder %v270, 1
  %vm295 = vcmp.eq.s32.totalorder %v273, 1
  %vm296 = vcmp.eq.s32.totalorder %v276, 1
  %vm297 = vcmp.eq.s32.totalorder %v279, 1
  %vm298 = vcmp.eq.s32.totalorder %v282, 1
  %v299 = vlaneseq
  %v300 = vshrl.u32 %v299, 7
  %v301 = vsub.s32 0, %v300
  %v302 = vrot.slane %v218, %v301
  %v303 = vsel %vm283, %v302, 0.0
  %v304 = vsel %vm284, %v302, 0.0
  %v305 = vsel %vm285, %v302, 0.0
  %v306 = vsel %vm286, %v302, 0.0
  %v307 = vsel %vm287, %v302, 0.0
  %v308 = vsel %vm288, %v302, 0.0
  %v309 = vsel %vm289, %v302, 0.0
  %v310 = vsel %vm290, %v302, 0.0
  %v311 = vsel %vm291, %v302, 0.0
  %v312 = vsel %vm292, %v302, 0.0
  %v313 = vsel %vm293, %v302, 0.0
  %v314 = vsel %vm294, %v302, 0.0
  %v315 = vsel %vm295, %v302, 0.0
  %v316 = vsel %vm296, %v302, 0.0
  %v317 = vsel %vm297, %v302, 0.0
  %v318 = vsel %vm298, %v302, 0.0
  %v319 = vadd.f32 %v186, %v303
  %v320 = vadd.f32 %v187, %v304
  %v321 = vadd.f32 %v188, %v305
  %v322 = vadd.f32 %v189, %v306
  %v323 = vadd.f32 %v190, %v307
  %v324 = vadd.f32 %v191, %v308
  %v325 = vadd.f32 %v192, %v309
  %v326 = vadd.f32 %v193, %v310
  %v327 = vadd.f32 %v194, %v311
  %v328 = vadd.f32 %v195, %v312
  %v329 = vadd.f32 %v196, %v313
  %v330 = vadd.f32 %v197, %v314
  %v331 = vadd.f32 %v198, %v315
  %v332 = vadd.f32 %v199, %v316
  %v333 = vadd.f32 %v200, %v317
  %v334 = vadd.f32 %v201, %v318
  %vm335 = vcmp.eq.s32.totalorder %v53, 2
  %vm336 = vcmp.eq.s32.totalorder %v54, 2
  %vm337 = vcmp.eq.s32.totalorder %v55, 2
  %vm338 = vcmp.eq.s32.totalorder %v56, 2
  %vm339 = vcmp.eq.s32.totalorder %v57, 2
  %vm340 = vcmp.eq.s32.totalorder %v58, 2
  %vm341 = vcmp.eq.s32.totalorder %v59, 2
  %vm342 = vcmp.eq.s32.totalorder %v60, 2
  %vm343 = vcmp.eq.s32.totalorder %v61, 2
  %vm344 = vcmp.eq.s32.totalorder %v62, 2
  %vm345 = vcmp.eq.s32.totalorder %v63, 2
  %vm346 = vcmp.eq.s32.totalorder %v64, 2
  %vm347 = vcmp.eq.s32.totalorder %v65, 2
  %vm348 = vcmp.eq.s32.totalorder %v66, 2
  %vm349 = vcmp.eq.s32.totalorder %v67, 2
  %vm350 = vcmp.eq.s32.totalorder %v68, 2
  %v351 = vld [vmem:[%s3 + $0x2] sm:$0x1]
  %v352 = vsel %vm335, 1, 0
  %v353 = vsel %vm336, 1, 0
  %v354 = vsel %vm337, 1, 0
  %v355 = vsel %vm338, 1, 0
  %v356 = vsel %vm339, 1, 0
  %v357 = vsel %vm340, 1, 0
  %v358 = vsel %vm341, 1, 0
  %v359 = vsel %vm342, 1, 0
  %v360 = vsel %vm343, 1, 0
  %v361 = vsel %vm344, 1, 0
  %v362 = vsel %vm345, 1, 0
  %v363 = vsel %vm346, 1, 0
  %v364 = vsel %vm347, 1, 0
  %v365 = vsel %vm348, 1, 0
  %v366 = vsel %vm349, 1, 0
  %v367 = vsel %vm350, 1, 0
  %368 = vset.pattern.permute.xlu0 0
  %369 = vperm.xlu0 %368, %v352
  %v370 = vpop.permute.xlu0 %369
  %371 = vset.pattern.permute.xlu0 0
  %372 = vperm.xlu0 %371, %v353
  %v373 = vpop.permute.xlu0 %372
  %374 = vset.pattern.permute.xlu0 0
  %375 = vperm.xlu0 %374, %v354
  %v376 = vpop.permute.xlu0 %375
  %377 = vset.pattern.permute.xlu0 0
  %378 = vperm.xlu0 %377, %v355
  %v379 = vpop.permute.xlu0 %378
  %380 = vset.pattern.permute.xlu0 0
  %381 = vperm.xlu0 %380, %v356
  %v382 = vpop.permute.xlu0 %381
  %383 = vset.pattern.permute.xlu0 0
  %384 = vperm.xlu0 %383, %v357
  %v385 = vpop.permute.xlu0 %384
  %386 = vset.pattern.permute.xlu0 0
  %387 = vperm.xlu0 %386, %v358
  %v388 = vpop.permute.xlu0 %387
  %389 = vset.pattern.permute.xlu0 0
  %390 = vperm.xlu0 %389, %v359
  %v391 = vpop.permute.xlu0 %390
  %392 = vset.pattern.permute.xlu0 0
  %393 = vperm.xlu0 %392, %v360
  %v394 = vpop.permute.xlu0 %393
  %395 = vset.pattern.permute.xlu0 0
  %396 = vperm.xlu0 %395, %v361
  %v397 = vpop.permute.xlu0 %396
  %398 = vset.pattern.permute.xlu0 0
  %399 = vperm.xlu0 %398, %v362
  %v400 = vpop.permute.xlu0 %399
  %401 = vset.pattern.permute.xlu0 0
  %402 = vperm.xlu0 %401, %v363
  %v403 = vpop.permute.xlu0 %402
  %404 = vset.pattern.permute.xlu0 0
  %405 = vperm.xlu0 %404, %v364
  %v406 = vpop.permute.xlu0 %405
  %407 = vset.pattern.permute.xlu0 0
  %408 = vperm.xlu0 %407, %v365
  %v409 = vpop.permute.xlu0 %408
  %410 = vset.pattern.permute.xlu0 0
  %411 = vperm.xlu0 %410, %v366
  %v412 = vpop.permute.xlu0 %411
  %413 = vset.pattern.permute.xlu0 0
  %414 = vperm.xlu0 %413, %v367
  %v415 = vpop.permute.xlu0 %414
  %vm416 = vcmp.eq.s32.totalorder %v370, 1
  %vm417 = vcmp.eq.s32.totalorder %v373, 1
  %vm418 = vcmp.eq.s32.totalorder %v376, 1
  %vm419 = vcmp.eq.s32.totalorder %v379, 1
  %vm420 = vcmp.eq.s32.totalorder %v382, 1
  %vm421 = vcmp.eq.s32.totalorder %v385, 1
  %vm422 = vcmp.eq.s32.totalorder %v388, 1
  %vm423 = vcmp.eq.s32.totalorder %v391, 1
  %vm424 = vcmp.eq.s32.totalorder %v394, 1
  %vm425 = vcmp.eq.s32.totalorder %v397, 1
  %vm426 = vcmp.eq.s32.totalorder %v400, 1
  %vm427 = vcmp.eq.s32.totalorder %v403, 1
  %vm428 = vcmp.eq.s32.totalorder %v406, 1
  %vm429 = vcmp.eq.s32.totalorder %v409, 1
  %vm430 = vcmp.eq.s32.totalorder %v412, 1
  %vm431 = vcmp.eq.s32.totalorder %v415, 1
  %v432 = vlaneseq
  %v433 = vshrl.u32 %v432, 7
  %v434 = vsub.s32 0, %v433
  %v435 = vrot.slane %v351, %v434
  %v436 = vsel %vm416, %v435, 0.0
  %v437 = vsel %vm417, %v435, 0.0
  %v438 = vsel %vm418, %v435, 0.0
  %v439 = vsel %vm419, %v435, 0.0
  %v440 = vsel %vm420, %v435, 0.0
  %v441 = vsel %vm421, %v435, 0.0
  %v442 = vsel %vm422, %v435, 0.0
  %v443 = vsel %vm423, %v435, 0.0
  %v444 = vsel %vm424, %v435, 0.0
  %v445 = vsel %vm425, %v435, 0.0
  %v446 = vsel %vm426, %v435, 0.0
  %v447 = vsel %vm427, %v435, 0.0
  %v448 = vsel %vm428, %v435, 0.0
  %v449 = vsel %vm429, %v435, 0.0
  %v450 = vsel %vm430, %v435, 0.0
  %v451 = vsel %vm431, %v435, 0.0
  %v452 = vadd.f32 %v319, %v436
  %v453 = vadd.f32 %v320, %v437
  %v454 = vadd.f32 %v321, %v438
  %v455 = vadd.f32 %v322, %v439
  %v456 = vadd.f32 %v323, %v440
  %v457 = vadd.f32 %v324, %v441
  %v458 = vadd.f32 %v325, %v442
  %v459 = vadd.f32 %v326, %v443
  %v460 = vadd.f32 %v327, %v444
  %v461 = vadd.f32 %v328, %v445
  %v462 = vadd.f32 %v329, %v446
  %v463 = vadd.f32 %v330, %v447
  %v464 = vadd.f32 %v331, %v448
  %v465 = vadd.f32 %v332, %v449
  %v466 = vadd.f32 %v333, %v450
  %v467 = vadd.f32 %v334, %v451
  %vm468 = vcmp.eq.s32.totalorder %v53, 3
  %vm469 = vcmp.eq.s32.totalorder %v54, 3
  %vm470 = vcmp.eq.s32.totalorder %v55, 3
  %vm471 = vcmp.eq.s32.totalorder %v56, 3
  %vm472 = vcmp.eq.s32.totalorder %v57, 3
  %vm473 = vcmp.eq.s32.totalorder %v58, 3
  %vm474 = vcmp.eq.s32.totalorder %v59, 3
  %vm475 = vcmp.eq.s32.totalorder %v60, 3
  %vm476 = vcmp.eq.s32.totalorder %v61, 3
  %vm477 = vcmp.eq.s32.totalorder %v62, 3
  %vm478 = vcmp.eq.s32.totalorder %v63, 3
  %vm479 = vcmp.eq.s32.totalorder %v64, 3
  %vm480 = vcmp.eq.s32.totalorder %v65, 3
  %vm481 = vcmp.eq.s32.totalorder %v66, 3
  %vm482 = vcmp.eq.s32.totalorder %v67, 3
  %vm483 = vcmp.eq.s32.totalorder %v68, 3
  %v484 = vld [vmem:[%s3 + $0x3] sm:$0x1]
  %v485 = vsel %vm468, 1, 0
  %v486 = vsel %vm469, 1, 0
  %v487 = vsel %vm470, 1, 0
  %v488 = vsel %vm471, 1, 0
  %v489 = vsel %vm472, 1, 0
  %v490 = vsel %vm473, 1, 0
  %v491 = vsel %vm474, 1, 0
  %v492 = vsel %vm475, 1, 0
  %v493 = vsel %vm476, 1, 0
  %v494 = vsel %vm477, 1, 0
  %v495 = vsel %vm478, 1, 0
  %v496 = vsel %vm479, 1, 0
  %v497 = vsel %vm480, 1, 0
  %v498 = vsel %vm481, 1, 0
  %v499 = vsel %vm482, 1, 0
  %v500 = vsel %vm483, 1, 0
  %501 = vset.pattern.permute.xlu0 0
  %502 = vperm.xlu0 %501, %v485
  %v503 = vpop.permute.xlu0 %502
  %504 = vset.pattern.permute.xlu0 0
  %505 = vperm.xlu0 %504, %v486
  %v506 = vpop.permute.xlu0 %505
  %507 = vset.pattern.permute.xlu0 0
  %508 = vperm.xlu0 %507, %v487
  %v509 = vpop.permute.xlu0 %508
  %510 = vset.pattern.permute.xlu0 0
  %511 = vperm.xlu0 %510, %v488
  %v512 = vpop.permute.xlu0 %511
  %513 = vset.pattern.permute.xlu0 0
  %514 = vperm.xlu0 %513, %v489
  %v515 = vpop.permute.xlu0 %514
  %516 = vset.pattern.permute.xlu0 0
  %517 = vperm.xlu0 %516, %v490
  %v518 = vpop.permute.xlu0 %517
  %519 = vset.pattern.permute.xlu0 0
  %520 = vperm.xlu0 %519, %v491
  %v521 = vpop.permute.xlu0 %520
  %522 = vset.pattern.permute.xlu0 0
  %523 = vperm.xlu0 %522, %v492
  %v524 = vpop.permute.xlu0 %523
  %525 = vset.pattern.permute.xlu0 0
  %526 = vperm.xlu0 %525, %v493
  %v527 = vpop.permute.xlu0 %526
  %528 = vset.pattern.permute.xlu0 0
  %529 = vperm.xlu0 %528, %v494
  %v530 = vpop.permute.xlu0 %529
  %531 = vset.pattern.permute.xlu0 0
  %532 = vperm.xlu0 %531, %v495
  %v533 = vpop.permute.xlu0 %532
  %534 = vset.pattern.permute.xlu0 0
  %535 = vperm.xlu0 %534, %v496
  %v536 = vpop.permute.xlu0 %535
  %537 = vset.pattern.permute.xlu0 0
  %538 = vperm.xlu0 %537, %v497
  %v539 = vpop.permute.xlu0 %538
  %540 = vset.pattern.permute.xlu0 0
  %541 = vperm.xlu0 %540, %v498
  %v542 = vpop.permute.xlu0 %541
  %543 = vset.pattern.permute.xlu0 0
  %544 = vperm.xlu0 %543, %v499
  %v545 = vpop.permute.xlu0 %544
  %546 = vset.pattern.permute.xlu0 0
  %547 = vperm.xlu0 %546, %v500
  %v548 = vpop.permute.xlu0 %547
  %vm549 = vcmp.eq.s32.totalorder %v503, 1
  %vm550 = vcmp.eq.s32.totalorder %v506, 1
  %vm551 = vcmp.eq.s32.totalorder %v509, 1
  %vm552 = vcmp.eq.s32.totalorder %v512, 1
  %vm553 = vcmp.eq.s32.totalorder %v515, 1
  %vm554 = vcmp.eq.s32.totalorder %v518, 1
  %vm555 = vcmp.eq.s32.totalorder %v521, 1
  %vm556 = vcmp.eq.s32.totalorder %v524, 1
  %vm557 = vcmp.eq.s32.totalorder %v527, 1
  %vm558 = vcmp.eq.s32.totalorder %v530, 1
  %vm559 = vcmp.eq.s32.totalorder %v533, 1
  %vm560 = vcmp.eq.s32.totalorder %v536, 1
  %vm561 = vcmp.eq.s32.totalorder %v539, 1
  %vm562 = vcmp.eq.s32.totalorder %v542, 1
  %vm563 = vcmp.eq.s32.totalorder %v545, 1
  %vm564 = vcmp.eq.s32.totalorder %v548, 1
  %v565 = vlaneseq
  %v566 = vshrl.u32 %v565, 7
  %v567 = vsub.s32 0, %v566
  %v568 = vrot.slane %v484, %v567
  %v569 = vsel %vm549, %v568, 0.0
  %v570 = vsel %vm550, %v568, 0.0
  %v571 = vsel %vm551, %v568, 0.0
  %v572 = vsel %vm552, %v568, 0.0
  %v573 = vsel %vm553, %v568, 0.0
  %v574 = vsel %vm554, %v568, 0.0
  %v575 = vsel %vm555, %v568, 0.0
  %v576 = vsel %vm556, %v568, 0.0
  %v577 = vsel %vm557, %v568, 0.0
  %v578 = vsel %vm558, %v568, 0.0
  %v579 = vsel %vm559, %v568, 0.0
  %v580 = vsel %vm560, %v568, 0.0
  %v581 = vsel %vm561, %v568, 0.0
  %v582 = vsel %vm562, %v568, 0.0
  %v583 = vsel %vm563, %v568, 0.0
  %v584 = vsel %vm564, %v568, 0.0
  %v585 = vadd.f32 %v452, %v569
  %v586 = vadd.f32 %v453, %v570
  %v587 = vadd.f32 %v454, %v571
  %v588 = vadd.f32 %v455, %v572
  %v589 = vadd.f32 %v456, %v573
  %v590 = vadd.f32 %v457, %v574
  %v591 = vadd.f32 %v458, %v575
  %v592 = vadd.f32 %v459, %v576
  %v593 = vadd.f32 %v460, %v577
  %v594 = vadd.f32 %v461, %v578
  %v595 = vadd.f32 %v462, %v579
  %v596 = vadd.f32 %v463, %v580
  %v597 = vadd.f32 %v464, %v581
  %v598 = vadd.f32 %v465, %v582
  %v599 = vadd.f32 %v466, %v583
  %v600 = vadd.f32 %v467, %v584
  %v605 = vunpack.c.l.b16 %v49
  %v606 = vunpack.c.l.b16 %v50
  %v607 = vunpack.c.l.b16 %v51
  %v608 = vunpack.c.l.b16 %v52
  %v609 = vpack.c.b16 %v606, %v605
  %v610 = vpack.c.b16 %v608, %v607
  %vm613 = vcmask 261120
  %v615 = vsel %vm613, %v41, 0
  %v618 = vsel %vm613, %v42, 0
  %v621 = vsel %vm613, %v43, 0
  %v624 = vsel %vm613, %v44, 0
  %v627 = vsel %vm613, %v45, 0
  %v630 = vsel %vm613, %v46, 0
  %v633 = vsel %vm613, %v47, 0
  %v636 = vsel %vm613, %v48, 0
  %638 = vmatprep.subr.bf16.mxu0 0
  %639 = vmatpush1.bf16.msra.mxu0 %v609
  %640 = vmatprep.subr.bf16.mxu0 0
  %641 = vmatpush1.bf16.msra.mxu0 %v610
  %642 = vmatprep.subr.bf16.mxu0 0
  %643 = vmatpush1.bf16.msra.mxu0 0
  %644 = vmatprep.subr.bf16.mxu0 0
  %645 = vmatpush1.bf16.msra.mxu0 0
  %646 = vmatprep.subr.bf16.mxu0 0
  %647 = vmatpush1.bf16.msra.mxu0 0
  %648 = vmatprep.subr.bf16.mxu0 0
  %649 = vmatpush1.bf16.msra.mxu0 0
  %650 = vmatprep.subr.bf16.mxu0 0
  %651 = vmatpush1.bf16.msra.mxu0 0
  %652 = vmatprep.subr.bf16.mxu0 0
  %653 = vmatpush1.bf16.msra.mxu0 0
  %654 = vmatprep.subr.bf16.mxu0 0
  %655 = vmatpush1.bf16.msra.mxu0 0
  %656 = vmatprep.subr.bf16.mxu0 0
  %657 = vmatpush1.bf16.msra.mxu0 0
  %658 = vmatprep.subr.bf16.mxu0 0
  %659 = vmatpush1.bf16.msra.mxu0 0
  %660 = vmatprep.subr.bf16.mxu0 0
  %661 = vmatpush1.bf16.msra.mxu0 0
  %662 = vmatprep.subr.bf16.mxu0 0
  %663 = vmatpush1.bf16.msra.mxu0 0
  %664 = vmatprep.subr.bf16.mxu0 0
  %665 = vmatpush1.bf16.msra.mxu0 0
  %666 = vmatprep.subr.bf16.mxu0 0
  %667 = vmatpush1.bf16.msra.mxu0 0
  %668 = vmatprep.subr.bf16.mxu0 0
  %669 = vmatpush1.bf16.msra.mxu0 0
  %670 = vmatprep.mubr.bf16.mxu0 0
  %671 = vmatmul.mubr.bf16.gmra.mrb[0].mxu0 %v615
  %v672 = vpop.f32.mrb[0].mxu0
  %v673 = vadd.f32 %v585, %v672
  %v674 = vpop.f32.mrb[0].mxu0
  %v675 = vpop.f32.mrb[0].mxu0
  %v676 = vadd.f32 %v586, %v675
  %v677 = vpop.f32.mrb[0].mxu0
  %678 = vmatprep.mubr.bf16.mxu0 0
  %679 = vmatmul.mubr.bf16.gmra.mrb[0].mxu0 %v618
  %v680 = vpop.f32.mrb[0].mxu0
  %v681 = vadd.f32 %v587, %v680
  %v682 = vpop.f32.mrb[0].mxu0
  %v683 = vpop.f32.mrb[0].mxu0
  %v684 = vadd.f32 %v588, %v683
  %v685 = vpop.f32.mrb[0].mxu0
  %686 = vmatprep.mubr.bf16.mxu0 0
  %687 = vmatmul.mubr.bf16.gmra.mrb[0].mxu0 %v621
  %v688 = vpop.f32.mrb[0].mxu0
  %v689 = vadd.f32 %v589, %v688
  %v690 = vpop.f32.mrb[0].mxu0
  %v691 = vpop.f32.mrb[0].mxu0
  %v692 = vadd.f32 %v590, %v691
  %v693 = vpop.f32.mrb[0].mxu0
  %694 = vmatprep.mubr.bf16.mxu0 0
  %695 = vmatmul.mubr.bf16.gmra.mrb[0].mxu0 %v624
  %v696 = vpop.f32.mrb[0].mxu0
  %v697 = vadd.f32 %v591, %v696
  %v698 = vpop.f32.mrb[0].mxu0
  %v699 = vpop.f32.mrb[0].mxu0
  %v700 = vadd.f32 %v592, %v699
  %v701 = vpop.f32.mrb[0].mxu0
  %702 = vmatprep.mubr.bf16.mxu0 0
  %703 = vmatmul.mubr.bf16.gmra.mrb[0].mxu0 %v627
  %v704 = vpop.f32.mrb[0].mxu0
  %v705 = vadd.f32 %v593, %v704
  %v706 = vpop.f32.mrb[0].mxu0
  %v707 = vpop.f32.mrb[0].mxu0
  %v708 = vadd.f32 %v594, %v707
  %v709 = vpop.f32.mrb[0].mxu0
  %710 = vmatprep.mubr.bf16.mxu0 0
  %711 = vmatmul.mubr.bf16.gmra.mrb[0].mxu0 %v630
  %v712 = vpop.f32.mrb[0].mxu0
  %v713 = vadd.f32 %v595, %v712
  %v714 = vpop.f32.mrb[0].mxu0
  %v715 = vpop.f32.mrb[0].mxu0
  %v716 = vadd.f32 %v596, %v715
  %v717 = vpop.f32.mrb[0].mxu0
  %718 = vmatprep.mubr.bf16.mxu0 0
  %719 = vmatmul.mubr.bf16.gmra.mrb[0].mxu0 %v633
  %v720 = vpop.f32.mrb[0].mxu0
  %v721 = vadd.f32 %v597, %v720
  %v722 = vpop.f32.mrb[0].mxu0
  %v723 = vpop.f32.mrb[0].mxu0
  %v724 = vadd.f32 %v598, %v723
  %v725 = vpop.f32.mrb[0].mxu0
  %726 = vmatprep.mubr.bf16.mxu0 0
  %727 = vmatmul.mubr.bf16.gmra.mrb[0].mxu0 %v636
  %v728 = vpop.f32.mrb[0].mxu0
  %v729 = vadd.f32 %v599, %v728
  %v730 = vpop.f32.mrb[0].mxu0
  %v731 = vpop.f32.mrb[0].mxu0
  %v732 = vadd.f32 %v600, %v731
  %v733 = vpop.f32.mrb[0].mxu0
  %734 = vdwg.mxu0
  %v735 = vmax.f32 %v673, 0.0
  %v736 = vmax.f32 %v676, 0.0
  %v737 = vmax.f32 %v681, 0.0
  %v738 = vmax.f32 %v684, 0.0
  %v739 = vmax.f32 %v689, 0.0
  %v740 = vmax.f32 %v692, 0.0
  %v741 = vmax.f32 %v697, 0.0
  %v742 = vmax.f32 %v700, 0.0
  %v743 = vmax.f32 %v705, 0.0
  %v744 = vmax.f32 %v708, 0.0
  %v745 = vmax.f32 %v713, 0.0
  %v746 = vmax.f32 %v716, 0.0
  %v747 = vmax.f32 %v721, 0.0
  %v748 = vmax.f32 %v724, 0.0
  %v749 = vmax.f32 %v729, 0.0
  %v750 = vmax.f32 %v732, 0.0
  %751 = vxpose.xlu0.b32.start [1/16] %v735, 128
  %752 = vxpose.xlu0.b32.cont [2/16] %v736, 128
  %753 = vxpose.xlu0.b32.cont [3/16] %v737, 128
  %754 = vxpose.xlu0.b32.cont [4/16] %v738, 128
  %755 = vxpose.xlu0.b32.cont [5/16] %v739, 128
  %756 = vxpose.xlu0.b32.cont [6/16] %v740, 128
  %757 = vxpose.xlu0.b32.cont [7/16] %v741, 128
  %758 = vxpose.xlu0.b32.cont [8/16] %v742, 128
  %759 = vxpose.xlu0.b32.cont [9/16] %v743, 128
  %760 = vxpose.xlu0.b32.cont [10/16] %v744, 128
  %761 = vxpose.xlu0.b32.cont [11/16] %v745, 128
  %762 = vxpose.xlu0.b32.cont [12/16] %v746, 128
  %763 = vxpose.xlu0.b32.cont [13/16] %v747, 128
  %764 = vxpose.xlu0.b32.cont [14/16] %v748, 128
  %765 = vxpose.xlu0.b32.cont [15/16] %v749, 128
  %766 = vxpose.xlu0.b32.end [16/16] %v750, 128
  %v767 = vpop.trf.xlu0
  %v768 = vpop.trf.xlu0
  %v769 = vpop.trf.xlu0
  %v770 = vpop.trf.xlu0
  %v771 = vpop.trf.xlu0
  %v772 = vpop.trf.xlu0
  %v773 = vpop.trf.xlu0
  %v774 = vpop.trf.xlu0
  %v775 = vpop.trf.xlu0
  %v776 = vpop.trf.xlu0
  %v777 = vpop.trf.xlu0
  %v778 = vpop.trf.xlu0
  %v779 = vpop.trf.xlu0
  %v780 = vpop.trf.xlu0
  %v781 = vpop.trf.xlu0
  %v782 = vpop.trf.xlu0
  %v783 = vld [vmem:[%s4] sm:$0xff]
  %v784 = vld [vmem:[%s4 + $0x8] sm:$0xff]
  %v785 = vld [vmem:[%s4 + $0x10] sm:$0xff]
  %v786 = vld [vmem:[%s4 + $0x18] sm:$0xff]
  %v787 = vld [vmem:[%s4 + $0x20] sm:$0xff]
  %v788 = vld [vmem:[%s4 + $0x28] sm:$0xff]
  %v789 = vld [vmem:[%s4 + $0x30] sm:$0xff]
  %v790 = vld [vmem:[%s4 + $0x38] sm:$0xff]
  %v791 = vld [vmem:[%s4 + $0x40] sm:$0xff]
  %v792 = vld [vmem:[%s4 + $0x48] sm:$0xff]
  %v793 = vld [vmem:[%s4 + $0x50] sm:$0xff]
  %v794 = vld [vmem:[%s4 + $0x58] sm:$0xff]
  %v795 = vld [vmem:[%s4 + $0x60] sm:$0xff]
  %v796 = vld [vmem:[%s4 + $0x68] sm:$0xff]
  %v797 = vld [vmem:[%s4 + $0x70] sm:$0xff]
  %v798 = vld [vmem:[%s4 + $0x78] sm:$0xff]
  %800 = vset.pattern.permute.xlu0 0
  %801 = vperm.xlu0 %800, %v783
  %v802 = vpop.permute.xlu0 %801
  %805 = vset.pattern.permute.xlu0 0
  %806 = vperm.xlu0 %805, %v784
  %v807 = vpop.permute.xlu0 %806
  %810 = vset.pattern.permute.xlu0 0
  %811 = vperm.xlu0 %810, %v785
  %v812 = vpop.permute.xlu0 %811
  %815 = vset.pattern.permute.xlu0 0
  %816 = vperm.xlu0 %815, %v786
  %v817 = vpop.permute.xlu0 %816
  %820 = vset.pattern.permute.xlu0 0
  %821 = vperm.xlu0 %820, %v787
  %v822 = vpop.permute.xlu0 %821
  %825 = vset.pattern.permute.xlu0 0
  %826 = vperm.xlu0 %825, %v788
  %v827 = vpop.permute.xlu0 %826
  %830 = vset.pattern.permute.xlu0 0
  %831 = vperm.xlu0 %830, %v789
  %v832 = vpop.permute.xlu0 %831
  %835 = vset.pattern.permute.xlu0 0
  %836 = vperm.xlu0 %835, %v790
  %v837 = vpop.permute.xlu0 %836
  %840 = vset.pattern.permute.xlu0 0
  %841 = vperm.xlu0 %840, %v791
  %v842 = vpop.permute.xlu0 %841
  %845 = vset.pattern.permute.xlu0 0
  %846 = vperm.xlu0 %845, %v792
  %v847 = vpop.permute.xlu0 %846
  %850 = vset.pattern.permute.xlu0 0
  %851 = vperm.xlu0 %850, %v793
  %v852 = vpop.permute.xlu0 %851
  %855 = vset.pattern.permute.xlu0 0
  %856 = vperm.xlu0 %855, %v794
  %v857 = vpop.permute.xlu0 %856
  %860 = vset.pattern.permute.xlu0 0
  %861 = vperm.xlu0 %860, %v795
  %v862 = vpop.permute.xlu0 %861
  %865 = vset.pattern.permute.xlu0 0
  %866 = vperm.xlu0 %865, %v796
  %v867 = vpop.permute.xlu0 %866
  %870 = vset.pattern.permute.xlu0 0
  %871 = vperm.xlu0 %870, %v797
  %v872 = vpop.permute.xlu0 %871
  %875 = vset.pattern.permute.xlu0 0
  %876 = vperm.xlu0 %875, %v798
  %v877 = vpop.permute.xlu0 %876
  %v879 = vmul.f32 %v767, %v802
  %v880 = vmul.f32 %v768, %v807
  %v881 = vmul.f32 %v769, %v812
  %v882 = vmul.f32 %v770, %v817
  %v883 = vmul.f32 %v771, %v822
  %v884 = vmul.f32 %v772, %v827
  %v885 = vmul.f32 %v773, %v832
  %v886 = vmul.f32 %v774, %v837
  %v887 = vmul.f32 %v775, %v842
  %v888 = vmul.f32 %v776, %v847
  %v889 = vmul.f32 %v777, %v852
  %v890 = vmul.f32 %v778, %v857
  %v891 = vmul.f32 %v779, %v862
  %v892 = vmul.f32 %v780, %v867
  %v893 = vmul.f32 %v781, %v872
  %v894 = vmul.f32 %v782, %v877
  %v895 = vadd.f32 %v879, %v880
  %v896 = vadd.f32 %v895, %v881
  %v897 = vadd.f32 %v896, %v882
  %v898 = vadd.f32 %v897, %v883
  %v899 = vadd.f32 %v898, %v884
  %v900 = vadd.f32 %v899, %v885
  %v901 = vadd.f32 %v900, %v886
  %v902 = vadd.f32 %v901, %v887
  %v903 = vadd.f32 %v902, %v888
  %v904 = vadd.f32 %v903, %v889
  %v905 = vadd.f32 %v904, %v890
  %v906 = vadd.f32 %v905, %v891
  %v907 = vadd.f32 %v906, %v892
  %v908 = vadd.f32 %v907, %v893
  %v909 = vadd.f32 %v908, %v894
  %v910 = vrot.slane %v909, 4
  %v911 = vadd.f32 %v909, %v910
  %v912 = vrot.slane %v911, 2
  %v913 = vadd.f32 %v911, %v912
  %v914 = vrot.slane %v913, 1
  %v915 = vadd.f32 %v913, %v914
  %s916 = sld [smem:[#allocation2]]
  %v917 = vstv %s916
  %v918 = vadd.f32 %v915, %v917
  %919 = vst [vmem:[%s6] sm:$0x1] %v918
  // Predicated region
  $region26: #{discriminator_forward.1} parent=0 // pred_check
    _
  $region27: #{discriminator_forward.1} parent=0 // pred_check_branch
    %921 = sbr.rel (0) target = $region29
  $region28: #{discriminator_forward.1} parent=0 // pred_region
    _
  $region29: #{discriminator_forward.1} parent=0 // pred_fallthru
    _
  // Predicated region
  $region30: #{discriminator_forward.1} parent=0 // pred_check
    _
  $region31: #{discriminator_forward.1} parent=0 // pred_check_branch
    %923 = sbr.rel (0) target = $region33
  $region32: #{discriminator_forward.1} parent=0 // pred_region
    _
  $region33: #{discriminator_forward.1} parent=0 // pred_fallthru
    _

</llo_original>
